<compile_context>
chip_gen: v5e
topology: v5e:2x2
jax: 0.10.0
libtpu: 0.0.40
codegen_flags: <defaults>
</compile_context>

<pallas_src>
import functools

import jax
import jax.numpy as jnp
from jax.experimental import pallas as pl
from jax.experimental.pallas import tpu as pltpu


def _round_up(x, m):
    return (x + m - 1) // m * m


# ----------------------------------------------------------------------------
# Fused Pallas kernel: conv1 (im2col matmul) + bias + ReLU + fc, whole batch.
# ----------------------------------------------------------------------------
def _cnn_fused_kernel(patches_ref, wct_ref, fcw_ref, fcb_ref,
                      conv_ref, final_ref, *, n_img, p, p_pad, qp, c_out):
    # conv1 + bias + ReLU for ALL images in one MXU push (transposed
    # orientation):  (CP, KP) @ (KP, N*Ppad) -> (CP, N*Ppad).
    # The conv bias is folded into wct column K_real against the all-ones
    # patch row; wct columns > K_real are exactly zero (invariant!).
    conv_t = jnp.dot(wct_ref[...], patches_ref[...],
                     preferred_element_type=jnp.float32)
    conv_t = jnp.maximum(conv_t, 0.0)
    # Fully dense (8 sublanes x N*256 lanes) store -- no masked vst.
    conv_ref[...] = conv_t.astype(conv_ref.dtype)

    # fc: ONE MXU push per image with the full 8-row LHS.
    # fcw_ref is (P, C_out*QP): channel c occupies lane block [c*QP:(c+1)*QP].
    fcw = fcw_ref[...]
    bias = fcb_ref[...]                                   # (1, QP)
    rows = []
    for n in range(n_img):                                # unrolled (N tiny)
        # Per-image LHS slice starts at a multiple of 256 -> lane-tile aligned,
        # no relayout.
        lhs = conv_t[:, n * p_pad:n * p_pad + p]          # (CP, P)
        r = jnp.dot(lhs, fcw, preferred_element_type=jnp.float32)  # (CP, C_out*QP)
        acc = bias
        for c in range(c_out):                            # unrolled (C_out tiny)
            acc = acc + r[c:c + 1, c * qp:(c + 1) * qp]   # (1, QP) VPU adds
        rows.append(acc)
    final_ref[...] = jnp.concatenate(rows, axis=0).astype(final_ref.dtype)


# ----------------------------------------------------------------------------
# One-time weight layout prep (hoisted out of the per-call forward).
# ----------------------------------------------------------------------------
def prepare_params(params):
    conv_w = params["conv1_w"]   # (C_out, C_in, K, K)
    conv_b = params["conv1_b"]   # (C_out,)
    fc_w = params["fc_w"]        # (num_class, features), features = C_out*OH*OW
    fc_b = params["fc_b"]        # (num_class,)

    C_out, C_in, K, _ = conv_w.shape
    Q, F = fc_w.shape
    P = F // C_out
    K_real = C_in * K * K

    KP = _round_up(K_real + 1, 8)     # +1 column for the folded conv bias
    CP = _round_up(C_out, 8)          # sublane-aligned conv-output channels
    QP = _round_up(Q, 128)            # lane-dense FC output

    # conv weight (+bias) folded into one (CP, KP) matrix; cols > K_real are 0.
    w2d = conv_w.reshape(C_out, K_real)
    wct = jnp.concatenate([w2d, conv_b[:, None]], axis=1)          # (C_out, K_real+1)
    wct = jnp.pad(wct, ((0, CP - C_out), (0, KP - (K_real + 1))))  # (CP, KP)

    # fc weight stacked so one MXU dot per image consumes the (CP, P) conv
    # layout directly: fcw_s[p, c*QP + q] = fc_w[q, c*P + p].
    fcw = fc_w.reshape(Q, C_out, P).transpose(2, 1, 0)             # (P, C_out, Q)
    fcw = jnp.pad(fcw, ((0, 0), (0, 0), (0, QP - Q)))              # (P, C_out, QP)
    fcw_s = fcw.reshape(P, C_out * QP)
    fcb_p = jnp.pad(fc_b, (0, QP - Q)).reshape(1, QP)

    return {"wct": wct, "fcw_s": fcw_s, "fcb": fcb_p}


# ----------------------------------------------------------------------------
# CNN forward (matches CNN.forward: returns (out, flat_out, final, f_same))
# ----------------------------------------------------------------------------
@functools.partial(jax.jit, static_argnames=("kernel", "num_class"))
def cnn_forward(img, prep, *, kernel, num_class):
    wct, fcw_s, fcb = prep["wct"], prep["fcw_s"], prep["fcb"]

    N, C_in, H, W = img.shape
    OH, OW = H - kernel + 1, W - kernel + 1
    P = OH * OW
    K_real = C_in * kernel * kernel

    CP, KP = wct.shape
    QP = fcb.shape[1]
    C_out = fcw_s.shape[1] // QP
    Ppad = _round_up(P, 128)          # per-image lane block (144 -> 256)
    NPpad = N * Ppad

    # --- im2col: one XLA op; feature order (C_in, kh, kw) == torch flatten ---
    patches = jax.lax.conv_general_dilated_patches(
        img, filter_shape=(kernel, kernel), window_strides=(1, 1),
        padding="VALID")                                   # (N, C_in*K*K, OH, OW)
    patches = patches.reshape(N, K_real, P)                # (N, 75, 144)
    # Pad contraction rows with ONES: row K_real is the bias input (wct columns
    # beyond K_real are zero, so the extra 1-rows are inert).
    patches = jnp.pad(patches, ((0, 0), (0, KP - K_real), (0, 0)),
                      constant_values=1.0)                 # (N, KP, P)
    # Pad per-image lanes with ZEROS (dead columns -> conv output 0 there).
    patches = jnp.pad(patches, ((0, 0), (0, 0), (0, Ppad - P)))  # (N, KP, Ppad)
    # Batch-concatenate along lanes: (KP, N*Ppad).
    patches = patches.transpose(1, 0, 2).reshape(KP, NPpad)

    flops = 2 * CP * KP * NPpad + N * (2 * CP * P * (C_out * QP))
    bytes_accessed = 4 * (KP * NPpad + CP * KP + P * C_out * QP + QP
                          + CP * NPpad + N * QP)

    conv_out, final_p = pl.pallas_call(
        functools.partial(_cnn_fused_kernel, n_img=N, p=P, p_pad=Ppad,
                          qp=QP, c_out=C_out),
        out_shape=(
            jax.ShapeDtypeStruct((CP, NPpad), img.dtype),   # dense conv result
            jax.ShapeDtypeStruct((N, QP), img.dtype),       # padded logits
        ),
        grid=(1,),                                          # single step: whole batch
        in_specs=[
            pl.BlockSpec((KP, NPpad), lambda i: (0, 0)),          # patches
            pl.BlockSpec((CP, KP), lambda i: (0, 0)),             # conv weight(+bias)
            pl.BlockSpec((P, C_out * QP), lambda i: (0, 0)),      # fc weight (stacked)
            pl.BlockSpec((1, QP), lambda i: (0, 0)),              # fc bias
        ],
        out_specs=(
            pl.BlockSpec((CP, NPpad), lambda i: (0, 0)),
            pl.BlockSpec((N, QP), lambda i: (0, 0)),
        ),
        compiler_params=pltpu.CompilerParams(
            dimension_semantics=("arbitrary",)),
        cost_estimate=pl.CostEstimate(flops=flops, transcendentals=0,
                                      bytes_accessed=bytes_accessed),
    )(patches, wct, fcw_s, fcb)

    # Wrapper-side layout plumbing (pure reshapes/slices on tiny arrays).
    conv_nc = conv_out[:C_out].reshape(C_out, N, Ppad)[:, :, :P]   # (C_out, N, P)
    out = conv_nc.transpose(1, 0, 2).reshape(N, C_out, OH, OW)     # NCHW
    flat_out = out.reshape(N, C_out * OH * OW)      # == torch out.view(-1, features)
    final = final_p[:, :num_class]
    f_same = None
    return out, flat_out, final, f_same


# ----------------------------------------------------------------------------
# Deterministic parameter init (synthetic)
# ----------------------------------------------------------------------------
def init_params(key, *, in_channels, out_channels, kernel, features, num_class):
    k1, k2, k3, k4 = jax.random.split(key, 4)
    fan_in_conv = in_channels * kernel * kernel
    bound_c = 1.0 / jnp.sqrt(fan_in_conv)
    bound_f = 1.0 / jnp.sqrt(features)
    return {
        "conv1_w": jax.random.uniform(
            k1, (out_channels, in_channels, kernel, kernel),
            minval=-bound_c, maxval=bound_c, dtype=jnp.float32),
        "conv1_b": jax.random.uniform(
            k2, (out_channels,), minval=-bound_c, maxval=bound_c,
            dtype=jnp.float32),
        "fc_w": jax.random.uniform(
            k3, (num_class, features), minval=-bound_f, maxval=bound_f,
            dtype=jnp.float32),
        "fc_b": jax.random.uniform(
            k4, (num_class,), minval=-bound_f, maxval=bound_f,
            dtype=jnp.float32),
    }
    # TODO(synk): conv2 (ConvTranspose2d) / use_bn BatchNorm exist in __init__
    # but are never used in forward(), so they are not instantiated here.


if __name__ == "__main__":
    # Small shapes consistent with the module: img_size=16, in_ch=3, out_ch=3,
    # kernel=5, num_class=10, batch=2.
    img_size, in_channels, out_channels, kernel, num_class, batch = 16, 3, 3, 5, 10, 2
    oh = img_size - kernel + 1
    features = oh * oh * out_channels

    key = jax.random.PRNGKey(0)
    k_img, k_par = jax.random.split(key)
    img = jax.random.normal(k_img, (batch, in_channels, img_size, img_size),
                            dtype=jnp.float32)
    params = init_params(k_par, in_channels=in_channels,
                         out_channels=out_channels, kernel=kernel,
                         features=features, num_class=num_class)

    # One-time weight layout prep (cached across forward calls).
    prep = prepare_params(params)

    out, flat_out, final, f_same = cnn_forward(img, prep, kernel=kernel,
                                               num_class=num_class)
    jax.block_until_ready((out, flat_out, final))

    # Reference check against plain-JAX conv/matmul.
    ref_conv = jax.lax.conv_general_dilated(
        img, params["conv1_w"], window_strides=(1, 1), padding="VALID",
        dimension_numbers=("NCHW", "OIHW", "NCHW"))
    ref_out = jnp.maximum(ref_conv + params["conv1_b"][None, :, None, None], 0.0)
    ref_flat = ref_out.reshape(-1, features)
    ref_final = ref_flat @ params["fc_w"].T + params["fc_b"]

    assert out.shape == (batch, out_channels, oh, oh)
    assert flat_out.shape == (batch, features)
    assert final.shape == (batch, num_class)
    assert f_same is None
    assert jnp.allclose(out, ref_out, atol=1e-4, rtol=1e-4)
    assert jnp.allclose(flat_out, ref_flat, atol=1e-4, rtol=1e-4)
    assert jnp.allclose(final, ref_final, atol=1e-4, rtol=1e-4)

    print("KERNEL_OK")
</pallas_src>

<mosaic_0001>
module attributes {stable_mosaic.version = 11 : i64} {
  func.func @_cnn_fused_kernel(%arg0: i32, %arg1: memref<80x512xf32, #tpu.memory_space<vmem>>, %arg2: memref<8x80xf32, #tpu.memory_space<vmem>>, %arg3: memref<144x384xf32, #tpu.memory_space<vmem>>, %arg4: memref<1x128xf32, #tpu.memory_space<vmem>>, %arg5: memref<8x512xf32, #tpu.memory_space<vmem>>, %arg6: memref<2x128xf32, #tpu.memory_space<vmem>>) attributes {dimension_semantics = [#tpu.dimension_semantics<arbitrary>], iteration_bounds = array<i64: 1>, scalar_prefetch = 0 : i64, scratch_operands = 0 : i64, tpu.core_type = #tpu.core_type<tc>, window_params = [{pipeline_mode = #tpu.pipeline_mode<synchronous>, transform_indices = @transform_0, window_bounds = array<i64: 80, 512>}, {pipeline_mode = #tpu.pipeline_mode<synchronous>, transform_indices = @transform_1, window_bounds = array<i64: 8, 80>}, {pipeline_mode = #tpu.pipeline_mode<synchronous>, transform_indices = @transform_2, window_bounds = array<i64: 144, 384>}, {pipeline_mode = #tpu.pipeline_mode<synchronous>, transform_indices = @transform_3, window_bounds = array<i64: 1, 128>}, {pipeline_mode = #tpu.pipeline_mode<synchronous>, transform_indices = @transform_4, window_bounds = array<i64: 8, 512>}, {pipeline_mode = #tpu.pipeline_mode<synchronous>, transform_indices = @transform_5, window_bounds = array<i64: 2, 128>}]} {
    %c0 = arith.constant 0 : index
    %c0_0 = arith.constant 0 : index
    %0 = vector.load %arg2[%c0, %c0_0] : memref<8x80xf32, #tpu.memory_space<vmem>>, vector<8x80xf32>
    %c0_1 = arith.constant 0 : index
    %c0_2 = arith.constant 0 : index
    %1 = vector.load %arg1[%c0_1, %c0_2] : memref<80x512xf32, #tpu.memory_space<vmem>>, vector<80x512xf32>
    %cst = arith.constant dense<0.000000e+00> : vector<8x512xf32>
    %2 = tpu.matmul %0, %1, %cst {dimension_numbers = #tpu.dot_dimension_numbers<[1], [0], [0], [1], [0, 0, 1, 1], [], []>} : vector<8x80xf32>, vector<80x512xf32>, vector<8x512xf32> -> vector<8x512xf32>
    %cst_3 = arith.constant 0.000000e+00 : f32
    %3 = vector.broadcast %cst_3 : f32 to vector<8x512xf32>
    %4 = arith.maximumf %2, %3 : vector<8x512xf32>
    %c0_4 = arith.constant 0 : index
    %c0_5 = arith.constant 0 : index
    %5 = vector.load %arg5[%c0_4, %c0_5] : memref<8x512xf32, #tpu.memory_space<vmem>>, vector<8x512xf32>
    tpu.vector_store %arg5[%c0_4, %c0_5], %4 {strides = array<i32>} : memref<8x512xf32, #tpu.memory_space<vmem>>, vector<8x512xf32>,
    %c0_6 = arith.constant 0 : index
    %c0_7 = arith.constant 0 : index
    %6 = vector.load %arg3[%c0_6, %c0_7] : memref<144x384xf32, #tpu.memory_space<vmem>>, vector<144x384xf32>
    %c0_8 = arith.constant 0 : index
    %c0_9 = arith.constant 0 : index
    %7 = vector.load %arg4[%c0_8, %c0_9] : memref<1x128xf32, #tpu.memory_space<vmem>>, vector<1x128xf32>
    %8 = vector.extract_strided_slice %4 {offsets = [0, 0], sizes = [8, 144], strides = [1, 1]} : vector<8x512xf32> to vector<8x144xf32>
    %cst_10 = arith.constant dense<0.000000e+00> : vector<8x384xf32>
    %9 = tpu.matmul %8, %6, %cst_10 {dimension_numbers = #tpu.dot_dimension_numbers<[1], [0], [0], [1], [0, 0, 1, 1], [], []>} : vector<8x144xf32>, vector<144x384xf32>, vector<8x384xf32> -> vector<8x384xf32>
    %10 = vector.extract_strided_slice %9 {offsets = [0, 0], sizes = [1, 128], strides = [1, 1]} : vector<8x384xf32> to vector<1x128xf32>
    %11 = arith.addf %7, %10 : vector<1x128xf32>
    %12 = vector.extract_strided_slice %9 {offsets = [1, 128], sizes = [1, 128], strides = [1, 1]} : vector<8x384xf32> to vector<1x128xf32>
    %13 = arith.addf %11, %12 : vector<1x128xf32>
    %14 = vector.extract_strided_slice %9 {offsets = [2, 256], sizes = [1, 128], strides = [1, 1]} : vector<8x384xf32> to vector<1x128xf32>
    %15 = arith.addf %13, %14 : vector<1x128xf32>
    %16 = vector.extract_strided_slice %4 {offsets = [0, 256], sizes = [8, 144], strides = [1, 1]} : vector<8x512xf32> to vector<8x144xf32>
    %cst_11 = arith.constant dense<0.000000e+00> : vector<8x384xf32>
    %17 = tpu.matmul %16, %6, %cst_11 {dimension_numbers = #tpu.dot_dimension_numbers<[1], [0], [0], [1], [0, 0, 1, 1], [], []>} : vector<8x144xf32>, vector<144x384xf32>, vector<8x384xf32> -> vector<8x384xf32>
    %18 = vector.extract_strided_slice %17 {offsets = [0, 0], sizes = [1, 128], strides = [1, 1]} : vector<8x384xf32> to vector<1x128xf32>
    %19 = arith.addf %7, %18 : vector<1x128xf32>
    %20 = vector.extract_strided_slice %17 {offsets = [1, 128], sizes = [1, 128], strides = [1, 1]} : vector<8x384xf32> to vector<1x128xf32>
    %21 = arith.addf %19, %20 : vector<1x128xf32>
    %22 = vector.extract_strided_slice %17 {offsets = [2, 256], sizes = [1, 128], strides = [1, 1]} : vector<8x384xf32> to vector<1x128xf32>
    %23 = arith.addf %21, %22 : vector<1x128xf32>
    %24 = tpu.concatenate %15, %23 in 0 : vector<1x128xf32>, vector<1x128xf32> -> vector<2x128xf32>
    %c0_12 = arith.constant 0 : index
    %c0_13 = arith.constant 0 : index
    %25 = vector.load %arg6[%c0_12, %c0_13] : memref<2x128xf32, #tpu.memory_space<vmem>>, vector<2x128xf32>
    tpu.vector_store %arg6[%c0_12, %c0_13], %24 {strides = array<i32>} : memref<2x128xf32, #tpu.memory_space<vmem>>, vector<2x128xf32>,
    return
  }
  func.func @transform_0(%arg0: i32) -> (i32, i32) {
    %c0_i32 = arith.constant 0 : i32
    %c0_i32_0 = arith.constant 0 : i32
    %c0_i32_1 = arith.constant 0 : i32
    return %c0_i32, %c0_i32_0 : i32, i32
  }
  func.func @transform_1(%arg0: i32) -> (i32, i32) {
    %c0_i32 = arith.constant 0 : i32
    %c0_i32_0 = arith.constant 0 : i32
    %c0_i32_1 = arith.constant 0 : i32
    return %c0_i32, %c0_i32_0 : i32, i32
  }
  func.func @transform_2(%arg0: i32) -> (i32, i32) {
    %c0_i32 = arith.constant 0 : i32
    %c0_i32_0 = arith.constant 0 : i32
    %c0_i32_1 = arith.constant 0 : i32
    return %c0_i32, %c0_i32_0 : i32, i32
  }
  func.func @transform_3(%arg0: i32) -> (i32, i32) {
    %c0_i32 = arith.constant 0 : i32
    %c0_i32_0 = arith.constant 0 : i32
    %c0_i32_1 = arith.constant 0 : i32
    return %c0_i32, %c0_i32_0 : i32, i32
  }
  func.func @transform_4(%arg0: i32) -> (i32, i32) {
    %c0_i32 = arith.constant 0 : i32
    %c0_i32_0 = arith.constant 0 : i32
    %c0_i32_1 = arith.constant 0 : i32
    return %c0_i32, %c0_i32_0 : i32, i32
  }
  func.func @transform_5(%arg0: i32) -> (i32, i32) {
    %c0_i32 = arith.constant 0 : i32
    %c0_i32_0 = arith.constant 0 : i32
    %c0_i32_1 = arith.constant 0 : i32
    return %c0_i32, %c0_i32_0 : i32, i32
  }
}

</mosaic_0001>

<llo_original>
// kernel: cnn_forward.1
$region0: #{cnn_forward.1}
  #allocation0 [shape = 'u32[]', space=smem, size = 0x4, offset = 0x4, fixed_abs, tag = 'smem constant byte address 0x4 - core index']
  #allocation1 [shape = 'u32[72,128]{1,0:T(1,128)}', space=vmem, size = 0x9000, scoped, tag = 'internal scratch']
  %s0 = inlined_call_operand.vmem [shape: f32[80,512], index: 0, kind: input, shape index: {}]
  %s1 = inlined_call_operand.vmem [shape: f32[8,80], index: 1, kind: input, shape index: {}]
  %s2 = inlined_call_operand.vmem [shape: f32[144,384], index: 2, kind: input, shape index: {}]
  %s3 = inlined_call_operand.vmem [shape: f32[1,128], index: 3, kind: input, shape index: {}]
  %s4 = inlined_call_operand.vmem [shape: f32[8,512], index: 4, kind: output, shape index: {0}]
  %s5 = inlined_call_operand.hbm [shape: f32[2,128], index: 5, kind: output, shape index: {1}]
  %6 = xla_tuple %s4, %s5
  %s7 = sld [smem:[#allocation0]]
  $region34: #{cnn_forward.1} parent=0
    _
  %s9 = ssub.s32 1, %s7
  %s10 = scalar_select 0, %s9, %s7
  $region1: #{cnn_forward.1} parent=0
    #allocation2 [shape = 'u8[1024]{0}', space=vmem, size = 0x400, scoped, tag = 'output window, operand 1, single buffered']
    #allocation3 [shape = 's32[1]{0}', space=sflag, size = 0x4, scoped, tag = 'scoped memory for cnn_forward.1']
    %11 = vsyncpa [#allocation3], 0
    // Predicated region
    $region2: #{cnn_forward.1} parent=1 // pred_check
      _
    $region3: #{cnn_forward.1} parent=1 // pred_check_branch
      %13 = sbr.rel (0) target = $region5
    $region4: #{cnn_forward.1} parent=1 // pred_region
      _
    $region5: #{cnn_forward.1} parent=1 // pred_fallthru
      _
    // Predicated region
    $region6: #{cnn_forward.1} parent=1 // pred_check
      _
    $region7: #{cnn_forward.1} parent=1 // pred_check_branch
      %15 = sbr.rel (0) target = $region9
    $region8: #{cnn_forward.1} parent=1 // pred_region
      _
    $region9: #{cnn_forward.1} parent=1 // pred_fallthru
      _
    // Predicated region
    $region10: #{cnn_forward.1} parent=1 // pred_check
      _
    $region11: #{cnn_forward.1} parent=1 // pred_check_branch
      %17 = sbr.rel (0) target = $region13
    $region12: #{cnn_forward.1} parent=1 // pred_region
      _
    $region13: #{cnn_forward.1} parent=1 // pred_fallthru
      _
    // Predicated region
    $region14: #{cnn_forward.1} parent=1 // pred_check
      _
    $region15: #{cnn_forward.1} parent=1 // pred_check_branch
      %19 = sbr.rel (0) target = $region17
    $region16: #{cnn_forward.1} parent=1 // pred_region
      _
    $region17: #{cnn_forward.1} parent=1 // pred_fallthru
      _
    %v20 = vld [vmem:[%s1] sm:$0xff]
    %v21 = vld [vmem:[%s0] sm:$0xff]
    %v22 = vld [vmem:[%s0 + $0x8] sm:$0xff]
    %v23 = vld [vmem:[%s0 + $0x10] sm:$0xff]
    %v24 = vld [vmem:[%s0 + $0x18] sm:$0xff]
    %v25 = vld [vmem:[%s0 + $0x20] sm:$0xff]
    %v26 = vld [vmem:[%s0 + $0x28] sm:$0xff]
    %v27 = vld [vmem:[%s0 + $0x30] sm:$0xff]
    %v28 = vld [vmem:[%s0 + $0x38] sm:$0xff]
    %v29 = vld [vmem:[%s0 + $0x40] sm:$0xff]
    %v30 = vld [vmem:[%s0 + $0x48] sm:$0xff]
    %v31 = vld [vmem:[%s0 + $0x50] sm:$0xff]
    %v32 = vld [vmem:[%s0 + $0x58] sm:$0xff]
    %v33 = vld [vmem:[%s0 + $0x60] sm:$0xff]
    %v34 = vld [vmem:[%s0 + $0x68] sm:$0xff]
    %v35 = vld [vmem:[%s0 + $0x70] sm:$0xff]
    %v36 = vld [vmem:[%s0 + $0x78] sm:$0xff]
    %v37 = vld [vmem:[%s0 + $0x80] sm:$0xff]
    %v38 = vld [vmem:[%s0 + $0x88] sm:$0xff]
    %v39 = vld [vmem:[%s0 + $0x90] sm:$0xff]
    %v40 = vld [vmem:[%s0 + $0x98] sm:$0xff]
    %v41 = vld [vmem:[%s0 + $0xa0] sm:$0xff]
    %v42 = vld [vmem:[%s0 + $0xa8] sm:$0xff]
    %v43 = vld [vmem:[%s0 + $0xb0] sm:$0xff]
    %v44 = vld [vmem:[%s0 + $0xb8] sm:$0xff]
    %v45 = vld [vmem:[%s0 + $0xc0] sm:$0xff]
    %v46 = vld [vmem:[%s0 + $0xc8] sm:$0xff]
    %v47 = vld [vmem:[%s0 + $0xd0] sm:$0xff]
    %v48 = vld [vmem:[%s0 + $0xd8] sm:$0xff]
    %v49 = vld [vmem:[%s0 + $0xe0] sm:$0xff]
    %v50 = vld [vmem:[%s0 + $0xe8] sm:$0xff]
    %v51 = vld [vmem:[%s0 + $0xf0] sm:$0xff]
    %v52 = vld [vmem:[%s0 + $0xf8] sm:$0xff]
    %v53 = vld [vmem:[%s0 + $0x100] sm:$0xff]
    %v54 = vld [vmem:[%s0 + $0x108] sm:$0xff]
    %v55 = vld [vmem:[%s0 + $0x110] sm:$0xff]
    %v56 = vld [vmem:[%s0 + $0x118] sm:$0xff]
    %v57 = vld [vmem:[%s0 + $0x120] sm:$0xff]
    %v58 = vld [vmem:[%s0 + $0x128] sm:$0xff]
    %v59 = vld [vmem:[%s0 + $0x130] sm:$0xff]
    %v60 = vld [vmem:[%s0 + $0x138] sm:$0xff]
    %vm61 = vcmask 654336
    %v63 = vsel %vm61, %v20, 0
    %65 = vmatpush.msra.mxu0 0.0
    %66 = vmatpush.msra.mxu0 0.0
    %67 = vmatpush.msra.mxu0 0.0
    %68 = vmatpush.msra.mxu0 0.0
    %69 = vmatpush.msra.mxu0 0.0
    %70 = vmatpush.msra.mxu0 0.0
    %71 = vmatpush.msra.mxu0 %v57
    %72 = vmatpush.msra.mxu0 %v53
    %73 = vmatpush.msra.mxu0 %v49
    %74 = vmatpush.msra.mxu0 %v45
    %75 = vmatpush.msra.mxu0 %v41
    %76 = vmatpush.msra.mxu0 %v37
    %77 = vmatpush.msra.mxu0 %v33
    %78 = vmatpush.msra.mxu0 %v29
    %79 = vmatpush.msra.mxu0 %v25
    %80 = vmatpush.msra.mxu0 %v21
    %81 = vmatmul.f32.gmra.mxu0 %v63
    %v82 = vpop.f32.mrf.mxu0
    %v83 = vadd.f32 0.0, %v82
    %84 = vdwg.mxu0
    %85 = vmatpush.msra.mxu0 0.0
    %86 = vmatpush.msra.mxu0 0.0
    %87 = vmatpush.msra.mxu0 0.0
    %88 = vmatpush.msra.mxu0 0.0
    %89 = vmatpush.msra.mxu0 0.0
    %90 = vmatpush.msra.mxu0 0.0
    %91 = vmatpush.msra.mxu0 %v58
    %92 = vmatpush.msra.mxu0 %v54
    %93 = vmatpush.msra.mxu0 %v50
    %94 = vmatpush.msra.mxu0 %v46
    %95 = vmatpush.msra.mxu0 %v42
    %96 = vmatpush.msra.mxu0 %v38
    %97 = vmatpush.msra.mxu0 %v34
    %98 = vmatpush.msra.mxu0 %v30
    %99 = vmatpush.msra.mxu0 %v26
    %100 = vmatpush.msra.mxu0 %v22
    %101 = vmatmul.f32.gmra.mxu0 %v63
    %v102 = vpop.f32.mrf.mxu0
    %v103 = vadd.f32 0.0, %v102
    %104 = vdwg.mxu0
    %105 = vmatpush.msra.mxu0 0.0
    %106 = vmatpush.msra.mxu0 0.0
    %107 = vmatpush.msra.mxu0 0.0
    %108 = vmatpush.msra.mxu0 0.0
    %109 = vmatpush.msra.mxu0 0.0
    %110 = vmatpush.msra.mxu0 0.0
    %111 = vmatpush.msra.mxu0 %v59
    %112 = vmatpush.msra.mxu0 %v55
    %113 = vmatpush.msra.mxu0 %v51
    %114 = vmatpush.msra.mxu0 %v47
    %115 = vmatpush.msra.mxu0 %v43
    %116 = vmatpush.msra.mxu0 %v39
    %117 = vmatpush.msra.mxu0 %v35
    %118 = vmatpush.msra.mxu0 %v31
    %119 = vmatpush.msra.mxu0 %v27
    %120 = vmatpush.msra.mxu0 %v23
    %121 = vmatmul.f32.gmra.mxu0 %v63
    %v122 = vpop.f32.mrf.mxu0
    %v123 = vadd.f32 0.0, %v122
    %124 = vdwg.mxu0
    %125 = vmatpush.msra.mxu0 0.0
    %126 = vmatpush.msra.mxu0 0.0
    %127 = vmatpush.msra.mxu0 0.0
    %128 = vmatpush.msra.mxu0 0.0
    %129 = vmatpush.msra.mxu0 0.0
    %130 = vmatpush.msra.mxu0 0.0
    %131 = vmatpush.msra.mxu0 %v60
    %132 = vmatpush.msra.mxu0 %v56
    %133 = vmatpush.msra.mxu0 %v52
    %134 = vmatpush.msra.mxu0 %v48
    %135 = vmatpush.msra.mxu0 %v44
    %136 = vmatpush.msra.mxu0 %v40
    %137 = vmatpush.msra.mxu0 %v36
    %138 = vmatpush.msra.mxu0 %v32
    %139 = vmatpush.msra.mxu0 %v28
    %140 = vmatpush.msra.mxu0 %v24
    %141 = vmatmul.f32.gmra.mxu0 %v63
    %v142 = vpop.f32.mrf.mxu0
    %v143 = vadd.f32 0.0, %v142
    %144 = vdwg.mxu0
    %v145 = vmax.f32 %v83, 0.0
    %v146 = vmax.f32 %v103, 0.0
    %v147 = vmax.f32 %v123, 0.0
    %v148 = vmax.f32 %v143, 0.0
    %149 = vst [vmem:[%s4] sm:$0xff] %v145
    %150 = vst [vmem:[%s4 + $0x8] sm:$0xff] %v146
    %151 = vst [vmem:[%s4 + $0x10] sm:$0xff] %v147
    %152 = vst [vmem:[%s4 + $0x18] sm:$0xff] %v148
    %v153 = vld [vmem:[%s2] sm:$0xff]
    %v154 = vld [vmem:[%s2 + $0x8] sm:$0xff]
    %v155 = vld [vmem:[%s2 + $0x10] sm:$0xff]
    %v156 = vld [vmem:[%s2 + $0x18] sm:$0xff]
    %v157 = vld [vmem:[%s2 + $0x20] sm:$0xff]
    %v158 = vld [vmem:[%s2 + $0x28] sm:$0xff]
    %v159 = vld [vmem:[%s2 + $0x30] sm:$0xff]
    %v160 = vld [vmem:[%s2 + $0x38] sm:$0xff]
    %v161 = vld [vmem:[%s2 + $0x40] sm:$0xff]
    %v162 = vld [vmem:[%s2 + $0x48] sm:$0xff]
    %v163 = vld [vmem:[%s2 + $0x50] sm:$0xff]
    %v164 = vld [vmem:[%s2 + $0x58] sm:$0xff]
    %v165 = vld [vmem:[%s2 + $0x60] sm:$0xff]
    %v166 = vld [vmem:[%s2 + $0x68] sm:$0xff]
    %v167 = vld [vmem:[%s2 + $0x70] sm:$0xff]
    %v168 = vld [vmem:[%s2 + $0x78] sm:$0xff]
    %v169 = vld [vmem:[%s2 + $0x80] sm:$0xff]
    %v170 = vld [vmem:[%s2 + $0x88] sm:$0xff]
    %v171 = vld [vmem:[%s2 + $0x90] sm:$0xff]
    %v172 = vld [vmem:[%s2 + $0x98] sm:$0xff]
    %v173 = vld [vmem:[%s2 + $0xa0] sm:$0xff]
    %v174 = vld [vmem:[%s2 + $0xa8] sm:$0xff]
    %v175 = vld [vmem:[%s2 + $0xb0] sm:$0xff]
    %v176 = vld [vmem:[%s2 + $0xb8] sm:$0xff]
    %v177 = vld [vmem:[%s2 + $0xc0] sm:$0xff]
    %v178 = vld [vmem:[%s2 + $0xc8] sm:$0xff]
    %v179 = vld [vmem:[%s2 + $0xd0] sm:$0xff]
    %v180 = vld [vmem:[%s2 + $0xd8] sm:$0xff]
    %v181 = vld [vmem:[%s2 + $0xe0] sm:$0xff]
    %v182 = vld [vmem:[%s2 + $0xe8] sm:$0xff]
    %v183 = vld [vmem:[%s2 + $0xf0] sm:$0xff]
    %v184 = vld [vmem:[%s2 + $0xf8] sm:$0xff]
    %v185 = vld [vmem:[%s2 + $0x100] sm:$0xff]
    %v186 = vld [vmem:[%s2 + $0x108] sm:$0xff]
    %v187 = vld [vmem:[%s2 + $0x110] sm:$0xff]
    %v188 = vld [vmem:[%s2 + $0x118] sm:$0xff]
    %v189 = vld [vmem:[%s2 + $0x120] sm:$0xff]
    %v190 = vld [vmem:[%s2 + $0x128] sm:$0xff]
    %v191 = vld [vmem:[%s2 + $0x130] sm:$0xff]
    %v192 = vld [vmem:[%s2 + $0x138] sm:$0xff]
    %v193 = vld [vmem:[%s2 + $0x140] sm:$0xff]
    %v194 = vld [vmem:[%s2 + $0x148] sm:$0xff]
    %v195 = vld [vmem:[%s2 + $0x150] sm:$0xff]
    %v196 = vld [vmem:[%s2 + $0x158] sm:$0xff]
    %v197 = vld [vmem:[%s2 + $0x160] sm:$0xff]
    %v198 = vld [vmem:[%s2 + $0x168] sm:$0xff]
    %v199 = vld [vmem:[%s2 + $0x170] sm:$0xff]
    %v200 = vld [vmem:[%s2 + $0x178] sm:$0xff]
    %v201 = vld [vmem:[%s2 + $0x180] sm:$0xff]
    %v202 = vld [vmem:[%s2 + $0x188] sm:$0xff]
    %v203 = vld [vmem:[%s2 + $0x190] sm:$0xff]
    %v204 = vld [vmem:[%s2 + $0x198] sm:$0xff]
    %v205 = vld [vmem:[%s2 + $0x1a0] sm:$0xff]
    %v206 = vld [vmem:[%s2 + $0x1a8] sm:$0xff]
    %v207 = vld [vmem:[%s3] sm:$0x1]
    %vm208 = vcmask 130048
    %v210 = vsel %vm208, %v146, 0
    %212 = vmatpush.msra.mxu0 %v198
    %213 = vmatpush.msra.mxu0 %v195
    %214 = vmatpush.msra.mxu0 %v192
    %215 = vmatpush.msra.mxu0 %v189
    %216 = vmatpush.msra.mxu0 %v186
    %217 = vmatpush.msra.mxu0 %v183
    %218 = vmatpush.msra.mxu0 %v180
    %219 = vmatpush.msra.mxu0 %v177
    %220 = vmatpush.msra.mxu0 %v174
    %221 = vmatpush.msra.mxu0 %v171
    %222 = vmatpush.msra.mxu0 %v168
    %223 = vmatpush.msra.mxu0 %v165
    %224 = vmatpush.msra.mxu0 %v162
    %225 = vmatpush.msra.mxu0 %v159
    %226 = vmatpush.msra.mxu0 %v156
    %227 = vmatpush.msra.mxu0 %v153
    %228 = vmatmul.f32.gmra.mxu0 %v145
    %v229 = vpop.f32.mrf.mxu0
    %v230 = vadd.f32 0.0, %v229
    %231 = vdwg.mxu0
    %232 = vmatpush.msra.mxu0 0.0
    %233 = vmatpush.msra.mxu0 0.0
    %234 = vmatpush.msra.mxu0 0.0
    %235 = vmatpush.msra.mxu0 0.0
    %236 = vmatpush.msra.mxu0 0.0
    %237 = vmatpush.msra.mxu0 0.0
    %238 = vmatpush.msra.mxu0 0.0
    %239 = vmatpush.msra.mxu0 0.0
    %240 = vmatpush.msra.mxu0 0.0
    %241 = vmatpush.msra.mxu0 0.0
    %242 = vmatpush.msra.mxu0 0.0
    %243 = vmatpush.msra.mxu0 0.0
    %244 = vmatpush.msra.mxu0 0.0
    %245 = vmatpush.msra.mxu0 0.0
    %246 = vmatpush.msra.mxu0 %v204
    %247 = vmatpush.msra.mxu0 %v201
    %248 = vmatmul.f32.gmra.mxu0 %v210
    %v249 = vpop.f32.mrf.mxu0
    %v250 = vadd.f32 %v230, %v249
    %251 = vdwg.mxu0
    %252 = vmatpush.msra.mxu0 %v199
    %253 = vmatpush.msra.mxu0 %v196
    %254 = vmatpush.msra.mxu0 %v193
    %255 = vmatpush.msra.mxu0 %v190
    %256 = vmatpush.msra.mxu0 %v187
    %257 = vmatpush.msra.mxu0 %v184
    %258 = vmatpush.msra.mxu0 %v181
    %259 = vmatpush.msra.mxu0 %v178
    %260 = vmatpush.msra.mxu0 %v175
    %261 = vmatpush.msra.mxu0 %v172
    %262 = vmatpush.msra.mxu0 %v169
    %263 = vmatpush.msra.mxu0 %v166
    %264 = vmatpush.msra.mxu0 %v163
    %265 = vmatpush.msra.mxu0 %v160
    %266 = vmatpush.msra.mxu0 %v157
    %267 = vmatpush.msra.mxu0 %v154
    %268 = vmatmul.f32.gmra.mxu0 %v145
    %v269 = vpop.f32.mrf.mxu0
    %v270 = vadd.f32 0.0, %v269
    %271 = vdwg.mxu0
    %272 = vmatpush.msra.mxu0 0.0
    %273 = vmatpush.msra.mxu0 0.0
    %274 = vmatpush.msra.mxu0 0.0
    %275 = vmatpush.msra.mxu0 0.0
    %276 = vmatpush.msra.mxu0 0.0
    %277 = vmatpush.msra.mxu0 0.0
    %278 = vmatpush.msra.mxu0 0.0
    %279 = vmatpush.msra.mxu0 0.0
    %280 = vmatpush.msra.mxu0 0.0
    %281 = vmatpush.msra.mxu0 0.0
    %282 = vmatpush.msra.mxu0 0.0
    %283 = vmatpush.msra.mxu0 0.0
    %284 = vmatpush.msra.mxu0 0.0
    %285 = vmatpush.msra.mxu0 0.0
    %286 = vmatpush.msra.mxu0 %v205
    %287 = vmatpush.msra.mxu0 %v202
    %288 = vmatmul.f32.gmra.mxu0 %v210
    %v289 = vpop.f32.mrf.mxu0
    %v290 = vadd.f32 %v270, %v289
    %291 = vdwg.mxu0
    %292 = vmatpush.msra.mxu0 %v200
    %293 = vmatpush.msra.mxu0 %v197
    %294 = vmatpush.msra.mxu0 %v194
    %295 = vmatpush.msra.mxu0 %v191
    %296 = vmatpush.msra.mxu0 %v188
    %297 = vmatpush.msra.mxu0 %v185
    %298 = vmatpush.msra.mxu0 %v182
    %299 = vmatpush.msra.mxu0 %v179
    %300 = vmatpush.msra.mxu0 %v176
    %301 = vmatpush.msra.mxu0 %v173
    %302 = vmatpush.msra.mxu0 %v170
    %303 = vmatpush.msra.mxu0 %v167
    %304 = vmatpush.msra.mxu0 %v164
    %305 = vmatpush.msra.mxu0 %v161
    %306 = vmatpush.msra.mxu0 %v158
    %307 = vmatpush.msra.mxu0 %v155
    %308 = vmatmul.f32.gmra.mxu0 %v145
    %v309 = vpop.f32.mrf.mxu0
    %v310 = vadd.f32 0.0, %v309
    %311 = vdwg.mxu0
    %312 = vmatpush.msra.mxu0 0.0
    %313 = vmatpush.msra.mxu0 0.0
    %314 = vmatpush.msra.mxu0 0.0
    %315 = vmatpush.msra.mxu0 0.0
    %316 = vmatpush.msra.mxu0 0.0
    %317 = vmatpush.msra.mxu0 0.0
    %318 = vmatpush.msra.mxu0 0.0
    %319 = vmatpush.msra.mxu0 0.0
    %320 = vmatpush.msra.mxu0 0.0
    %321 = vmatpush.msra.mxu0 0.0
    %322 = vmatpush.msra.mxu0 0.0
    %323 = vmatpush.msra.mxu0 0.0
    %324 = vmatpush.msra.mxu0 0.0
    %325 = vmatpush.msra.mxu0 0.0
    %326 = vmatpush.msra.mxu0 %v206
    %327 = vmatpush.msra.mxu0 %v203
    %328 = vmatmul.f32.gmra.mxu0 %v210
    %v329 = vpop.f32.mrf.mxu0
    %v330 = vadd.f32 %v310, %v329
    %331 = vdwg.mxu0
    %v332 = vadd.f32 %v207, %v250
    %334 = vst [vmem:[#allocation1] sm:$0xff] %v290
    %s335 = scalar_lea.vmem [#allocation1], 1
    %v336 = vld [vmem:[%s335] ss:$9 sm:$0xff]
    %v338 = vadd.f32 %v332, %v336
    %340 = vst [vmem:[#allocation1] sm:$0xff] %v330
    %s341 = scalar_lea.vmem [#allocation1], 2
    %v342 = vld [vmem:[%s341] ss:$9 sm:$0xff]
    %v344 = vadd.f32 %v338, %v342
    %v346 = vsel %vm208, %v148, 0
    %348 = vmatpush.msra.mxu0 %v198
    %349 = vmatpush.msra.mxu0 %v195
    %350 = vmatpush.msra.mxu0 %v192
    %351 = vmatpush.msra.mxu0 %v189
    %352 = vmatpush.msra.mxu0 %v186
    %353 = vmatpush.msra.mxu0 %v183
    %354 = vmatpush.msra.mxu0 %v180
    %355 = vmatpush.msra.mxu0 %v177
    %356 = vmatpush.msra.mxu0 %v174
    %357 = vmatpush.msra.mxu0 %v171
    %358 = vmatpush.msra.mxu0 %v168
    %359 = vmatpush.msra.mxu0 %v165
    %360 = vmatpush.msra.mxu0 %v162
    %361 = vmatpush.msra.mxu0 %v159
    %362 = vmatpush.msra.mxu0 %v156
    %363 = vmatpush.msra.mxu0 %v153
    %364 = vmatmul.f32.gmra.mxu0 %v147
    %v365 = vpop.f32.mrf.mxu0
    %v366 = vadd.f32 0.0, %v365
    %367 = vdwg.mxu0
    %368 = vmatpush.msra.mxu0 0.0
    %369 = vmatpush.msra.mxu0 0.0
    %370 = vmatpush.msra.mxu0 0.0
    %371 = vmatpush.msra.mxu0 0.0
    %372 = vmatpush.msra.mxu0 0.0
    %373 = vmatpush.msra.mxu0 0.0
    %374 = vmatpush.msra.mxu0 0.0
    %375 = vmatpush.msra.mxu0 0.0
    %376 = vmatpush.msra.mxu0 0.0
    %377 = vmatpush.msra.mxu0 0.0
    %378 = vmatpush.msra.mxu0 0.0
    %379 = vmatpush.msra.mxu0 0.0
    %380 = vmatpush.msra.mxu0 0.0
    %381 = vmatpush.msra.mxu0 0.0
    %382 = vmatpush.msra.mxu0 %v204
    %383 = vmatpush.msra.mxu0 %v201
    %384 = vmatmul.f32.gmra.mxu0 %v346
    %v385 = vpop.f32.mrf.mxu0
    %v386 = vadd.f32 %v366, %v385
    %387 = vdwg.mxu0
    %388 = vmatpush.msra.mxu0 %v199
    %389 = vmatpush.msra.mxu0 %v196
    %390 = vmatpush.msra.mxu0 %v193
    %391 = vmatpush.msra.mxu0 %v190
    %392 = vmatpush.msra.mxu0 %v187
    %393 = vmatpush.msra.mxu0 %v184
    %394 = vmatpush.msra.mxu0 %v181
    %395 = vmatpush.msra.mxu0 %v178
    %396 = vmatpush.msra.mxu0 %v175
    %397 = vmatpush.msra.mxu0 %v172
    %398 = vmatpush.msra.mxu0 %v169
    %399 = vmatpush.msra.mxu0 %v166
    %400 = vmatpush.msra.mxu0 %v163
    %401 = vmatpush.msra.mxu0 %v160
    %402 = vmatpush.msra.mxu0 %v157
    %403 = vmatpush.msra.mxu0 %v154
    %404 = vmatmul.f32.gmra.mxu0 %v147
    %v405 = vpop.f32.mrf.mxu0
    %v406 = vadd.f32 0.0, %v405
    %407 = vdwg.mxu0
    %408 = vmatpush.msra.mxu0 0.0
    %409 = vmatpush.msra.mxu0 0.0
    %410 = vmatpush.msra.mxu0 0.0
    %411 = vmatpush.msra.mxu0 0.0
    %412 = vmatpush.msra.mxu0 0.0
    %413 = vmatpush.msra.mxu0 0.0
    %414 = vmatpush.msra.mxu0 0.0
    %415 = vmatpush.msra.mxu0 0.0
    %416 = vmatpush.msra.mxu0 0.0
    %417 = vmatpush.msra.mxu0 0.0
    %418 = vmatpush.msra.mxu0 0.0
    %419 = vmatpush.msra.mxu0 0.0
    %420 = vmatpush.msra.mxu0 0.0
    %421 = vmatpush.msra.mxu0 0.0
    %422 = vmatpush.msra.mxu0 %v205
    %423 = vmatpush.msra.mxu0 %v202
    %424 = vmatmul.f32.gmra.mxu0 %v346
    %v425 = vpop.f32.mrf.mxu0
    %v426 = vadd.f32 %v406, %v425
    %427 = vdwg.mxu0
    %428 = vmatpush.msra.mxu0 %v200
    %429 = vmatpush.msra.mxu0 %v197
    %430 = vmatpush.msra.mxu0 %v194
    %431 = vmatpush.msra.mxu0 %v191
    %432 = vmatpush.msra.mxu0 %v188
    %433 = vmatpush.msra.mxu0 %v185
    %434 = vmatpush.msra.mxu0 %v182
    %435 = vmatpush.msra.mxu0 %v179
    %436 = vmatpush.msra.mxu0 %v176
    %437 = vmatpush.msra.mxu0 %v173
    %438 = vmatpush.msra.mxu0 %v170
    %439 = vmatpush.msra.mxu0 %v167
    %440 = vmatpush.msra.mxu0 %v164
    %441 = vmatpush.msra.mxu0 %v161
    %442 = vmatpush.msra.mxu0 %v158
    %443 = vmatpush.msra.mxu0 %v155
    %444 = vmatmul.f32.gmra.mxu0 %v147
    %v445 = vpop.f32.mrf.mxu0
    %v446 = vadd.f32 0.0, %v445
    %447 = vdwg.mxu0
    %448 = vmatpush.msra.mxu0 0.0
    %449 = vmatpush.msra.mxu0 0.0
    %450 = vmatpush.msra.mxu0 0.0
    %451 = vmatpush.msra.mxu0 0.0
    %452 = vmatpush.msra.mxu0 0.0
    %453 = vmatpush.msra.mxu0 0.0
    %454 = vmatpush.msra.mxu0 0.0
    %455 = vmatpush.msra.mxu0 0.0
    %456 = vmatpush.msra.mxu0 0.0
    %457 = vmatpush.msra.mxu0 0.0
    %458 = vmatpush.msra.mxu0 0.0
    %459 = vmatpush.msra.mxu0 0.0
    %460 = vmatpush.msra.mxu0 0.0
    %461 = vmatpush.msra.mxu0 0.0
    %462 = vmatpush.msra.mxu0 %v206
    %463 = vmatpush.msra.mxu0 %v203
    %464 = vmatmul.f32.gmra.mxu0 %v346
    %v465 = vpop.f32.mrf.mxu0
    %v466 = vadd.f32 %v446, %v465
    %467 = vdwg.mxu0
    %v468 = vadd.f32 %v207, %v386
    %470 = vst [vmem:[#allocation1] sm:$0xff] %v426
    %s471 = scalar_lea.vmem [#allocation1], 1
    %v472 = vld [vmem:[%s471] ss:$9 sm:$0xff]
    %v474 = vadd.f32 %v468, %v472
    %476 = vst [vmem:[#allocation1] sm:$0xff] %v466
    %s477 = scalar_lea.vmem [#allocation1], 2
    %v478 = vld [vmem:[%s477] ss:$9 sm:$0xff]
    %v480 = vadd.f32 %v474, %v478
    %v482 = vperm.slane %v480, 0
    %vm484 = vcmask 1040384
    %v485 = vsel %vm484, %v344, %v482
    %486 = vst [vmem:[#allocation2] sm:$0x3] %v485
    // Predicated region
    $region18: #{cnn_forward.1} parent=1 // pred_check
      _
    $region19: #{cnn_forward.1} parent=1 // pred_check_branch
      %488 = sbr.rel (0) target = $region21
    $region20: #{cnn_forward.1} parent=1 // pred_region
      _
    $region21: #{cnn_forward.1} parent=1 // pred_fallthru
      _
    // Predicated region
    $region22: #{cnn_forward.1} parent=1 // pred_check
      _
    $region23: #{cnn_forward.1} parent=1 // pred_check_branch
      %490 = sbr.rel (0) target = $region25
    $region24: #{cnn_forward.1} parent=1 // pred_region
      %492 = vsyncadd [#allocation3], 0
      %s494 = sshll.u32 [#allocation2], 4
      %s495 = int_to_ptr.vmem [resolvable:$true] %s494
      %s496 = sshll.u32 %s5, 4
      %s497 = int_to_ptr.hbm [resolvable:$true] %s496
      %499 = dma.vmem_to_hbm [thread:$0]  %s495, 32, %s497, [#allocation3]
    $region25: #{cnn_forward.1} parent=1 // pred_fallthru
      _
    // Predicated region
    $region26: #{cnn_forward.1} parent=1 // pred_check
      _
    $region27: #{cnn_forward.1} parent=1 // pred_check_branch
      %501 = sbr.rel (0) target = $region29
    $region28: #{cnn_forward.1} parent=1 // pred_region
      _
    $region29: #{cnn_forward.1} parent=1 // pred_fallthru
      _
    // Predicated region
    $region30: #{cnn_forward.1} parent=1 // pred_check
      _
    $region31: #{cnn_forward.1} parent=1 // pred_check_branch
      %503 = sbr.rel (0) target = $region33
    $region32: #{cnn_forward.1} parent=1 // pred_region
      %505 = dma.done [#allocation3], 32
    $region33: #{cnn_forward.1} parent=1 // pred_fallthru
      _
    %506 = vsyncpa [#allocation3], 1

</llo_original>
